<compile_context>
chip_gen: v5e
topology: v5e:2x2
jax: 0.10.0
libtpu: 0.0.40
codegen_flags: <defaults>
</compile_context>

<pallas_src>
import functools

import jax
import jax.numpy as jnp
from jax.experimental import pallas as pl
from jax.experimental.pallas import tpu as pltpu

LANE = 128       # minimum lane width for the packed bias tile
TILE_B = 1024    # max batch rows per grid step (per-row VMEM cost is ~150 B)


def _round_up(x, m):
    return ((x + m - 1) // m) * m


def _silu(x):
    return x * jax.nn.sigmoid(x)


def _dual_kernel(in_total, enc_out, half, out_dim,
                 x_ref, wenc_ref, w1_ref, w2_ref, bias_ref, out_ref):
    """One batch tile of the fused DualModel forward.

    x_ref    (TB, in_total+1) bf16 : [spectra | lc | p]
    wenc_ref (in_total+1, enc_out) bf16 : block-diag [wse 0; 0 wle; 0 0]
    w1_ref   (enc_out, half) bf16 : vstack([w1x, w1y])
    w2_ref   (half, out_dim) bf16
    bias_ref (8, >=128) f32 : rows = [bse|ble, b1, b2, w1p]
    out_ref  (TB, out_dim) f32
    """
    f32, bf16 = jnp.float32, jnp.bfloat16

    b_enc = bias_ref[0:1, :enc_out]      # (1, sd+ld)  [bse | ble]
    b1 = bias_ref[1:2, :half]            # (1, half)
    b2 = bias_ref[2:3, :out_dim]         # (1, out_dim)
    w1p = bias_ref[3:4, :half]           # (1, half)   f32 rank-1 p weight

    x = x_ref[...]                       # (TB, in_total+1) bf16

    # Fused encoders: single MXU dot against the block-diagonal weight.
    f = _silu(jnp.dot(x, wenc_ref[...], preferred_element_type=f32) + b_enc)

    # rank-1 p term: p is the last column of the fused input (VPU multiply).
    p_col = x[:, in_total:in_total + 1].astype(f32)      # (TB, 1)

    # pred_layer Linear #1 on concat([f_x, f_y, p]) -- concat-free.
    h = _silu(jnp.dot(f.astype(bf16), w1_ref[...], preferred_element_type=f32)
              + p_col * w1p + b1)

    # Dropout(p=0.3): identity in eval mode.
    # pred_layer Linear #2 -> (TB, out_dim), un-padded f32 store.
    out_ref[...] = (jnp.dot(h.astype(bf16), w2_ref[...],
                            preferred_element_type=f32)
                    + b2).astype(out_ref.dtype)


def dual_model_forward(spectra, lc, p, params, *, tile_b=TILE_B):
    B, s_in = spectra.shape
    _, l_in = lc.shape
    if p.shape != (B,):
        raise ValueError(f"p must have shape ({B},), got {p.shape}")

    sd = params["wse"].shape[1]
    ld = params["wle"].shape[1]
    half = params["w1x"].shape[1]
    out_dim = params["w2"].shape[1]
    in_total = s_in + l_in
    enc_out = sd + ld

    f32, bf16 = jnp.float32, jnp.bfloat16

    # ---- batch tiling -------------------------------------------------------
    # Multiple of 16 rows (bf16 sublane packing); cap at ceil(B/2) so the grid
    # has >= 2 steps and both v7x TensorCores get work.
    tb = min(tile_b, _round_up(max(1, -(-B // 2)), 16))
    tb = max(16, (tb // 16) * 16)
    b_pad = _round_up(max(B, tb), tb)
    grid = (b_pad // tb,)

    # ---- fused, VMEM-resident parameters ------------------------------------
    wenc = jnp.zeros((in_total + 1, enc_out), bf16)
    wenc = wenc.at[:s_in, :sd].set(params["wse"].astype(bf16))
    wenc = wenc.at[s_in:in_total, sd:].set(params["wle"].astype(bf16))
    w1 = jnp.concatenate([params["w1x"], params["w1y"]], axis=0).astype(bf16)
    w2 = params["w2"].astype(bf16)

    bias_cols = _round_up(max(enc_out, half, out_dim), LANE)
    bias = jnp.zeros((8, bias_cols), f32)
    bias = bias.at[0, :sd].set(params["bse"].reshape(sd))
    bias = bias.at[0, sd:enc_out].set(params["ble"].reshape(ld))
    bias = bias.at[1, :half].set(params["b1"].reshape(half))
    bias = bias.at[2, :out_dim].set(params["b2"].reshape(out_dim))
    bias = bias.at[3, :half].set(params["w1p"].reshape(half).astype(f32))

    # ---- single fused streamed input: [spectra | lc | p] bf16 ---------------
    x = jnp.concatenate(
        [spectra.astype(bf16), lc.astype(bf16), p.astype(bf16).reshape(B, 1)],
        axis=1)
    if b_pad != B:
        x = jnp.pad(x, ((0, b_pad - B), (0, 0)))

    const = lambda shape: pl.BlockSpec(shape, lambda i: (0, 0))

    kernel = functools.partial(_dual_kernel, in_total, enc_out, half, out_dim)

    flops = 2 * b_pad * ((in_total + 1) * enc_out
                         + enc_out * half + half * out_dim)
    transcendentals = b_pad * (enc_out + half)        # one exp per SiLU element
    bytes_accessed = int(
        x.size * 2                                    # streamed in (bf16)
        + b_pad * out_dim * 4                         # streamed out (f32)
        + (wenc.size + w1.size + w2.size) * 2         # resident bf16 weights
        + bias.size * 4)                              # resident f32 bias tile

    # NOTE: if step time were still DMA-exposed, pipeline_mode=pl.Buffered(3)
    # on the streamed spec is the next lever; with >=512-row tiles it is not.
    out_padded = pl.pallas_call(
        kernel,
        out_shape=jax.ShapeDtypeStruct((b_pad, out_dim), f32),
        grid=grid,
        in_specs=[
            pl.BlockSpec((tb, in_total + 1), lambda i: (i, 0)),
            const((in_total + 1, enc_out)),
            const((enc_out, half)),
            const((half, out_dim)),
            const((8, bias_cols)),
        ],
        out_specs=pl.BlockSpec((tb, out_dim), lambda i: (i, 0)),
        compiler_params=pltpu.CompilerParams(
            dimension_semantics=("parallel",)),
        cost_estimate=pl.CostEstimate(flops=int(flops),
                                      transcendentals=int(transcendentals),
                                      bytes_accessed=bytes_accessed),
    )(x, wenc, w1, w2, bias)

    return out_padded[:B]


def init_params(key, s_in, l_in, spectra_dims, lc_dims, output_dim):
    hidden = spectra_dims + lc_dims + 1      # +1 for the appended p scalar
    half = hidden // 2
    ks = jax.random.split(key, 6)

    def lin(k, fan_in, shape):
        return jax.random.normal(k, shape, jnp.float32) / jnp.sqrt(fan_in)

    w1 = lin(ks[4], hidden, (hidden, half))  # full first pred layer, then split
    return {
        "wse": lin(ks[0], s_in, (s_in, spectra_dims)),
        "bse": jnp.zeros((1, spectra_dims), jnp.float32),
        "wle": lin(ks[1], l_in, (l_in, lc_dims)),
        "ble": jnp.zeros((1, lc_dims), jnp.float32),
        "w1x": w1[:spectra_dims],                          # (spectra_dims, half)
        "w1y": w1[spectra_dims:spectra_dims + lc_dims],    # (lc_dims, half)
        "w1p": w1[spectra_dims + lc_dims:],                # (1, half)
        "b1": jnp.zeros((1, half), jnp.float32),
        "w2": lin(ks[5], half, (half, output_dim)),
        "b2": jnp.zeros((1, output_dim), jnp.float32),
    }


def reference_forward(spectra, lc, p, params):
    """Pure-JAX reference with the same bf16-storage / f32-accumulate recipe
    (p is bf16-quantized like the fused streamed input; w1p stays f32)."""
    f32, bf16 = jnp.float32, jnp.bfloat16
    s = spectra.astype(bf16)
    l = lc.astype(bf16)
    f_x = _silu(jnp.dot(s, params["wse"].astype(bf16),
                        preferred_element_type=f32) + params["bse"])
    f_y = _silu(jnp.dot(l, params["wle"].astype(bf16),
                        preferred_element_type=f32) + params["ble"])
    p_q = p.astype(bf16).astype(f32)[:, None]
    h = (jnp.dot(f_x.astype(bf16), params["w1x"].astype(bf16),
                 preferred_element_type=f32)
         + jnp.dot(f_y.astype(bf16), params["w1y"].astype(bf16),
                   preferred_element_type=f32)
         + p_q * params["w1p"].astype(f32)
         + params["b1"])
    h = _silu(h)
    return (jnp.dot(h.astype(bf16), params["w2"].astype(bf16),
                    preferred_element_type=f32) + params["b2"])


if __name__ == "__main__":
    B = 256                                      # -> tb = 128, grid = (2,)
    S_IN, L_IN = 32, 32
    SPECTRA_DIMS, LC_DIMS, OUT_DIM = 16, 16, 4   # hidden = 33, half = 16

    key = jax.random.PRNGKey(0)
    k_sp, k_lc, k_p, k_par = jax.random.split(key, 4)
    spectra = jax.random.normal(k_sp, (B, S_IN), jnp.float32)
    lc = jax.random.normal(k_lc, (B, L_IN), jnp.float32)
    p = jax.random.normal(k_p, (B,), jnp.float32)

    params = init_params(k_par, S_IN, L_IN, SPECTRA_DIMS, LC_DIMS, OUT_DIM)

    out = dual_model_forward(spectra, lc, p, params)
    out = jax.block_until_ready(out)

    ref = reference_forward(spectra, lc, p, params)
    assert out.shape == (B, OUT_DIM)
    err = float(jnp.max(jnp.abs(out - ref)))
    assert jnp.allclose(out, ref, atol=2e-3, rtol=2e-3), f"max abs err {err}"

    print("KERNEL_OK")
</pallas_src>

<mosaic_0001>
module attributes {stable_mosaic.version = 11 : i64} {
  func.func @_dual_kernel(%arg0: i32, %arg1: memref<128x65xbf16, #tpu.memory_space<vmem>>, %arg2: memref<65x32xbf16, #tpu.memory_space<vmem>>, %arg3: memref<32x16xbf16, #tpu.memory_space<vmem>>, %arg4: memref<16x4xbf16, #tpu.memory_space<vmem>>, %arg5: memref<8x128xf32, #tpu.memory_space<vmem>>, %arg6: memref<128x4xf32, #tpu.memory_space<vmem>>) attributes {dimension_semantics = [#tpu.dimension_semantics<parallel>], iteration_bounds = array<i64: 2>, scalar_prefetch = 0 : i64, scratch_operands = 0 : i64, tpu.core_type = #tpu.core_type<tc>, window_params = [{transform_indices = @transform_0, window_bounds = array<i64: 128, 65>}, {pipeline_mode = #tpu.pipeline_mode<synchronous>, transform_indices = @transform_1, window_bounds = array<i64: 65, 32>}, {pipeline_mode = #tpu.pipeline_mode<synchronous>, transform_indices = @transform_2, window_bounds = array<i64: 32, 16>}, {pipeline_mode = #tpu.pipeline_mode<synchronous>, transform_indices = @transform_3, window_bounds = array<i64: 16, 4>}, {pipeline_mode = #tpu.pipeline_mode<synchronous>, transform_indices = @transform_4, window_bounds = array<i64: 8, 128>}, {transform_indices = @transform_5, window_bounds = array<i64: 128, 4>}]} {
    %c0 = arith.constant 0 : index
    %c0_0 = arith.constant 0 : index
    %0 = vector.load %arg5[%c0, %c0_0] : memref<8x128xf32, #tpu.memory_space<vmem>>, vector<1x32xf32>
    %c1 = arith.constant 1 : index
    %c0_1 = arith.constant 0 : index
    %1 = vector.load %arg5[%c1, %c0_1] : memref<8x128xf32, #tpu.memory_space<vmem>>, vector<1x16xf32>
    %c2 = arith.constant 2 : index
    %c0_2 = arith.constant 0 : index
    %2 = vector.load %arg5[%c2, %c0_2] : memref<8x128xf32, #tpu.memory_space<vmem>>, vector<1x4xf32>
    %c3 = arith.constant 3 : index
    %c0_3 = arith.constant 0 : index
    %3 = vector.load %arg5[%c3, %c0_3] : memref<8x128xf32, #tpu.memory_space<vmem>>, vector<1x16xf32>
    %c0_4 = arith.constant 0 : index
    %c0_5 = arith.constant 0 : index
    %4 = vector.load %arg1[%c0_4, %c0_5] : memref<128x65xbf16, #tpu.memory_space<vmem>>, vector<128x65xbf16>
    %c0_6 = arith.constant 0 : index
    %c0_7 = arith.constant 0 : index
    %5 = vector.load %arg2[%c0_6, %c0_7] : memref<65x32xbf16, #tpu.memory_space<vmem>>, vector<65x32xbf16>
    %cst = arith.constant dense<0.000000e+00> : vector<128x32xf32>
    %6 = tpu.matmul %4, %5, %cst {dimension_numbers = #tpu.dot_dimension_numbers<[1], [0], [0], [1], [0, 0, 1, 1], [], []>} : vector<128x65xbf16>, vector<65x32xbf16>, vector<128x32xf32> -> vector<128x32xf32>
    %7 = vector.broadcast %0 : vector<1x32xf32> to vector<128x32xf32>
    %8 = arith.addf %6, %7 : vector<128x32xf32>
    %9 = arith.negf %8 : vector<128x32xf32>
    %10 = math.exp %9 : vector<128x32xf32>
    %cst_8 = arith.constant 1.000000e+00 : f32
    %11 = vector.broadcast %cst_8 : f32 to vector<128x32xf32>
    %12 = arith.addf %11, %10 : vector<128x32xf32>
    %13 = arith.divf %11, %12 : vector<128x32xf32>
    %14 = arith.mulf %8, %13 : vector<128x32xf32>
    %15 = vector.extract_strided_slice %4 {offsets = [0, 64], sizes = [128, 1], strides = [1, 1]} : vector<128x65xbf16> to vector<128x1xbf16>
    %16 = arith.extf %15 : vector<128x1xbf16> to vector<128x1xf32>
    %17 = arith.truncf %14 : vector<128x32xf32> to vector<128x32xbf16>
    %c0_9 = arith.constant 0 : index
    %c0_10 = arith.constant 0 : index
    %18 = vector.load %arg3[%c0_9, %c0_10] : memref<32x16xbf16, #tpu.memory_space<vmem>>, vector<32x16xbf16>
    %cst_11 = arith.constant dense<0.000000e+00> : vector<128x16xf32>
    %19 = tpu.matmul %17, %18, %cst_11 {dimension_numbers = #tpu.dot_dimension_numbers<[1], [0], [0], [1], [0, 0, 1, 1], [], []>} : vector<128x32xbf16>, vector<32x16xbf16>, vector<128x16xf32> -> vector<128x16xf32>
    %20 = vector.broadcast %16 : vector<128x1xf32> to vector<128x16xf32>
    %21 = vector.broadcast %3 : vector<1x16xf32> to vector<128x16xf32>
    %22 = arith.mulf %20, %21 : vector<128x16xf32>
    %23 = arith.addf %19, %22 : vector<128x16xf32>
    %24 = vector.broadcast %1 : vector<1x16xf32> to vector<128x16xf32>
    %25 = arith.addf %23, %24 : vector<128x16xf32>
    %26 = arith.negf %25 : vector<128x16xf32>
    %27 = math.exp %26 : vector<128x16xf32>
    %cst_12 = arith.constant 1.000000e+00 : f32
    %28 = vector.broadcast %cst_12 : f32 to vector<128x16xf32>
    %29 = arith.addf %28, %27 : vector<128x16xf32>
    %30 = arith.divf %28, %29 : vector<128x16xf32>
    %31 = arith.mulf %25, %30 : vector<128x16xf32>
    %32 = arith.truncf %31 : vector<128x16xf32> to vector<128x16xbf16>
    %c0_13 = arith.constant 0 : index
    %c0_14 = arith.constant 0 : index
    %33 = vector.load %arg4[%c0_13, %c0_14] : memref<16x4xbf16, #tpu.memory_space<vmem>>, vector<16x4xbf16>
    %cst_15 = arith.constant dense<0.000000e+00> : vector<128x4xf32>
    %34 = tpu.matmul %32, %33, %cst_15 {dimension_numbers = #tpu.dot_dimension_numbers<[1], [0], [0], [1], [0, 0, 1, 1], [], []>} : vector<128x16xbf16>, vector<16x4xbf16>, vector<128x4xf32> -> vector<128x4xf32>
    %35 = vector.broadcast %2 : vector<1x4xf32> to vector<128x4xf32>
    %36 = arith.addf %34, %35 : vector<128x4xf32>
    %c0_16 = arith.constant 0 : index
    %c0_17 = arith.constant 0 : index
    %37 = vector.load %arg6[%c0_16, %c0_17] : memref<128x4xf32, #tpu.memory_space<vmem>>, vector<128x4xf32>
    tpu.vector_store %arg6[%c0_16, %c0_17], %36 {strides = array<i32>} : memref<128x4xf32, #tpu.memory_space<vmem>>, vector<128x4xf32>,
    return
  }
  func.func @transform_0(%arg0: i32) -> (i32, i32) {
    %c0_i32 = arith.constant 0 : i32
    %c0_i32_0 = arith.constant 0 : i32
    return %arg0, %c0_i32 : i32, i32
  }
  func.func @transform_1(%arg0: i32) -> (i32, i32) {
    %c0_i32 = arith.constant 0 : i32
    %c0_i32_0 = arith.constant 0 : i32
    %c0_i32_1 = arith.constant 0 : i32
    return %c0_i32, %c0_i32_0 : i32, i32
  }
  func.func @transform_2(%arg0: i32) -> (i32, i32) {
    %c0_i32 = arith.constant 0 : i32
    %c0_i32_0 = arith.constant 0 : i32
    %c0_i32_1 = arith.constant 0 : i32
    return %c0_i32, %c0_i32_0 : i32, i32
  }
  func.func @transform_3(%arg0: i32) -> (i32, i32) {
    %c0_i32 = arith.constant 0 : i32
    %c0_i32_0 = arith.constant 0 : i32
    %c0_i32_1 = arith.constant 0 : i32
    return %c0_i32, %c0_i32_0 : i32, i32
  }
  func.func @transform_4(%arg0: i32) -> (i32, i32) {
    %c0_i32 = arith.constant 0 : i32
    %c0_i32_0 = arith.constant 0 : i32
    %c0_i32_1 = arith.constant 0 : i32
    return %c0_i32, %c0_i32_0 : i32, i32
  }
  func.func @transform_5(%arg0: i32) -> (i32, i32) {
    %c0_i32 = arith.constant 0 : i32
    %c0_i32_0 = arith.constant 0 : i32
    return %arg0, %c0_i32 : i32, i32
  }
}

</mosaic_0001>

<llo_original>
// kernel: tpu_custom_call.1
$region0: #{tpu_custom_call.1}
  #allocation0 [shape = 'u32[]', space=smem, size = 0x4, offset = 0x4, fixed_abs, tag = 'smem constant byte address 0x4 - core index']
  #allocation1 [shape = 'u32[72,128]{1,0:T(1,128)}', space=vmem, size = 0x9000, scoped, tag = 'internal scratch']
  %s0 = inlined_call_operand.vmem [shape: bf16[256,65], index: 0, kind: input, shape index: {}]
  %s1 = inlined_call_operand.vmem [shape: bf16[65,32], index: 1, kind: input, shape index: {}]
  %s2 = inlined_call_operand.vmem [shape: bf16[32,16], index: 2, kind: input, shape index: {}]
  %s3 = inlined_call_operand.vmem [shape: bf16[16,4], index: 3, kind: input, shape index: {}]
  %s4 = inlined_call_operand.vmem [shape: f32[8,128], index: 4, kind: input, shape index: {}]
  %s5 = inlined_call_operand.vmem [shape: f32[256,4], index: 5, kind: output, shape index: {}]
  %s6 = sld [smem:[#allocation0]]
  $region53: #{tpu_custom_call.1} parent=0
    _
  %s8 = ssub.s32 1, %s6
  %s9 = scalar_select 0, %s8, %s6
  loop: start=0, step=1, limit=4
  $region2: #{tpu_custom_call.1} parent=0 // loop_pre_header
    _
  $region3: #{tpu_custom_call.1} parent=0 // loop_header
    %s11 = sphi 0, %s15
    %p12 = scmp.ge.s32.totalorder %s11, 4
    %s21 = sphi 0, %s23
    %s24 = sphi 0, %s21
    %s25 = sphi 0, %s24
    %s41 = sphi 0, %s25
    %s45 = sphi 0, %s45
    %s47 = sphi 0, %s45
    %s48 = sphi 0, %s47
    %s62 = sphi 0, %s48
    %s66 = sphi 0, %s66
    %s68 = sphi 0, %s66
    %s69 = sphi 0, %s68
    %s83 = sphi 0, %s69
    %s87 = sphi 0, %s87
    %s89 = sphi 0, %s87
    %s90 = sphi 0, %s89
    %s104 = sphi 0, %s90
    %s108 = sphi 0, %s108
    %s110 = sphi 0, %s108
    %s111 = sphi 0, %s110
    %s125 = sphi 0, %s111
    %s131 = sphi 0, %s133
    %s134 = sphi 0, %s131
    %s135 = sphi 0, %s134
    %s151 = sphi 0, %s135
  $region4: #{tpu_custom_call.1} parent=0 // loop_header_branch
    %14 = sbr.rel (%p12) target = $region8
  $region5: #{tpu_custom_call.1} parent=0 // loop_body
    %s16 = ssub.s32 %s11, 1
    %s17 = ssub.s32 %s11, 2
    %s18 = sadd.s32 %s11, 1
    %s19 = ssub.s32 %s11, %s18
    %p20 = scmp.eq.s32.totalorder %s19, 0
    %s22 = sadd.s32 %s21, 1
    %s23 = scalar_select %p20, %s21, %s22
    %p26 = pneg %p20
    %p27 = scmp.eq.s32.totalorder %s11, 1
    %p28 = por %p26, %p27
    %p29 = scmp.ne.s32.totalorder %s21, %s24
    %p30 = scmp.eq.s32.totalorder %s11, 0
    %p31 = por %p29, %p30
    %p32 = scmp.ne.s32.totalorder %s21, %s24
    %p33 = scmp.eq.s32.totalorder %s16, 1
    %p34 = por %p32, %p33
    %p35 = scmp.ne.s32.totalorder %s24, %s25
    %p36 = scmp.eq.s32.totalorder %s16, 0
    %p37 = por %p35, %p36
    %p38 = scmp.ne.s32.totalorder %s24, %s25
    %p39 = scmp.eq.s32.totalorder %s17, 1
    %p40 = por %p38, %p39
    %p42 = scmp.ne.s32.totalorder %s25, %s41
    %p43 = scmp.eq.s32.totalorder %s17, 0
    %p44 = por %p42, %p43
    %s46 = sadd.s32 %s45, 1
    %p49 = scmp.eq.s32.totalorder %s11, 1
    %p50 = scmp.ne.s32.totalorder %s45, %s47
    %p51 = scmp.eq.s32.totalorder %s11, 0
    %p52 = por %p50, %p51
    %p53 = scmp.ne.s32.totalorder %s45, %s47
    %p54 = scmp.eq.s32.totalorder %s16, 1
    %p55 = por %p53, %p54
    %p56 = scmp.ne.s32.totalorder %s47, %s48
    %p57 = scmp.eq.s32.totalorder %s16, 0
    %p58 = por %p56, %p57
    %p59 = scmp.ne.s32.totalorder %s47, %s48
    %p60 = scmp.eq.s32.totalorder %s17, 1
    %p61 = por %p59, %p60
    %p63 = scmp.ne.s32.totalorder %s48, %s62
    %p64 = scmp.eq.s32.totalorder %s17, 0
    %p65 = por %p63, %p64
    %s67 = sadd.s32 %s66, 1
    %p70 = scmp.eq.s32.totalorder %s11, 1
    %p71 = scmp.ne.s32.totalorder %s66, %s68
    %p72 = scmp.eq.s32.totalorder %s11, 0
    %p73 = por %p71, %p72
    %p74 = scmp.ne.s32.totalorder %s66, %s68
    %p75 = scmp.eq.s32.totalorder %s16, 1
    %p76 = por %p74, %p75
    %p77 = scmp.ne.s32.totalorder %s68, %s69
    %p78 = scmp.eq.s32.totalorder %s16, 0
    %p79 = por %p77, %p78
    %p80 = scmp.ne.s32.totalorder %s68, %s69
    %p81 = scmp.eq.s32.totalorder %s17, 1
    %p82 = por %p80, %p81
    %p84 = scmp.ne.s32.totalorder %s69, %s83
    %p85 = scmp.eq.s32.totalorder %s17, 0
    %p86 = por %p84, %p85
    %s88 = sadd.s32 %s87, 1
    %p91 = scmp.eq.s32.totalorder %s11, 1
    %p92 = scmp.ne.s32.totalorder %s87, %s89
    %p93 = scmp.eq.s32.totalorder %s11, 0
    %p94 = por %p92, %p93
    %p95 = scmp.ne.s32.totalorder %s87, %s89
    %p96 = scmp.eq.s32.totalorder %s16, 1
    %p97 = por %p95, %p96
    %p98 = scmp.ne.s32.totalorder %s89, %s90
    %p99 = scmp.eq.s32.totalorder %s16, 0
    %p100 = por %p98, %p99
    %p101 = scmp.ne.s32.totalorder %s89, %s90
    %p102 = scmp.eq.s32.totalorder %s17, 1
    %p103 = por %p101, %p102
    %p105 = scmp.ne.s32.totalorder %s90, %s104
    %p106 = scmp.eq.s32.totalorder %s17, 0
    %p107 = por %p105, %p106
    %s109 = sadd.s32 %s108, 1
    %p112 = scmp.eq.s32.totalorder %s11, 1
    %p113 = scmp.ne.s32.totalorder %s108, %s110
    %p114 = scmp.eq.s32.totalorder %s11, 0
    %p115 = por %p113, %p114
    %p116 = scmp.ne.s32.totalorder %s108, %s110
    %p117 = scmp.eq.s32.totalorder %s16, 1
    %p118 = por %p116, %p117
    %p119 = scmp.ne.s32.totalorder %s110, %s111
    %p120 = scmp.eq.s32.totalorder %s16, 0
    %p121 = por %p119, %p120
    %p122 = scmp.ne.s32.totalorder %s110, %s111
    %p123 = scmp.eq.s32.totalorder %s17, 1
    %p124 = por %p122, %p123
    %p126 = scmp.ne.s32.totalorder %s111, %s125
    %p127 = scmp.eq.s32.totalorder %s17, 0
    %p128 = por %p126, %p127
    %s129 = ssub.s32 %s11, %s18
    %p130 = scmp.eq.s32.totalorder %s129, 0
    %s132 = sadd.s32 %s131, 1
    %s133 = scalar_select %p130, %s131, %s132
    %p136 = pneg %p130
    %p137 = scmp.eq.s32.totalorder %s11, 1
    %p138 = por %p136, %p137
    %p139 = scmp.ne.s32.totalorder %s131, %s134
    %p140 = scmp.eq.s32.totalorder %s11, 0
    %p141 = por %p139, %p140
    %p142 = scmp.ne.s32.totalorder %s131, %s134
    %p143 = scmp.eq.s32.totalorder %s16, 1
    %p144 = por %p142, %p143
    %p145 = scmp.ne.s32.totalorder %s134, %s135
    %p146 = scmp.eq.s32.totalorder %s16, 0
    %p147 = por %p145, %p146
    %p148 = scmp.ne.s32.totalorder %s134, %s135
    %p149 = scmp.eq.s32.totalorder %s17, 1
    %p150 = por %p148, %p149
    %p152 = scmp.ne.s32.totalorder %s135, %s151
    %p153 = scmp.eq.s32.totalorder %s17, 0
    %p154 = por %p152, %p153
    %p155 = scmp.le.s32.totalorder 1, %s11
    %p156 = scmp.lt.s32.totalorder %s11, 3
    %p157 = pnand %p155, %p156
    %p158 = pneg %p157
    // Predicated region
    $region9: #{tpu_custom_call.1} parent=5 // pred_check
      _
    $region10: #{tpu_custom_call.1} parent=5 // pred_check_branch
      %160 = sbr.rel (%p157) target = $region12
    $region11: #{tpu_custom_call.1} parent=5 // pred_region
      %s161 = ssub.s32 %s11, 1
      // Predicated region
      $region13: #{tpu_custom_call.1} parent=11 // pred_check
        %p162 = pneg %p58
      $region14: #{tpu_custom_call.1} parent=11 // pred_check_branch
        %164 = sbr.rel (%p162) target = $region16
      $region15: #{tpu_custom_call.1} parent=11 // pred_region
        _
      $region16: #{tpu_custom_call.1} parent=11 // pred_fallthru
        _
      // Predicated region
      $region17: #{tpu_custom_call.1} parent=11 // pred_check
        %p165 = pneg %p79
      $region18: #{tpu_custom_call.1} parent=11 // pred_check_branch
        %167 = sbr.rel (%p165) target = $region20
      $region19: #{tpu_custom_call.1} parent=11 // pred_region
        _
      $region20: #{tpu_custom_call.1} parent=11 // pred_fallthru
        _
      // Predicated region
      $region21: #{tpu_custom_call.1} parent=11 // pred_check
        %p168 = pneg %p100
      $region22: #{tpu_custom_call.1} parent=11 // pred_check_branch
        %170 = sbr.rel (%p168) target = $region24
      $region23: #{tpu_custom_call.1} parent=11 // pred_region
        _
      $region24: #{tpu_custom_call.1} parent=11 // pred_fallthru
        _
      // Predicated region
      $region25: #{tpu_custom_call.1} parent=11 // pred_check
        %p171 = pneg %p121
      $region26: #{tpu_custom_call.1} parent=11 // pred_check_branch
        %173 = sbr.rel (%p171) target = $region28
      $region27: #{tpu_custom_call.1} parent=11 // pred_region
        _
      $region28: #{tpu_custom_call.1} parent=11 // pred_fallthru
        _
    $region12: #{tpu_custom_call.1} parent=5 // pred_fallthru
      _
    %p174 = scmp.lt.s32.totalorder %s11, 2
    // Predicated region
    $region29: #{tpu_custom_call.1} parent=5 // pred_check
      %p175 = pneg %p174
    $region30: #{tpu_custom_call.1} parent=5 // pred_check_branch
      %177 = sbr.rel (%p175) target = $region32
    $region31: #{tpu_custom_call.1} parent=5 // pred_region
      // Predicated region
      $region33: #{tpu_custom_call.1} parent=31 // pred_check
        %p178 = pneg %p31
      $region34: #{tpu_custom_call.1} parent=31 // pred_check_branch
        %180 = sbr.rel (%p178) target = $region36
      $region35: #{tpu_custom_call.1} parent=31 // pred_region
        %s181 = smul.u32 16, %s11
        %p182 = scmp.lt.s32.totalorder %s181, 31
        %s183 = scalar_select %p182, %s181, 31
        %s184 = smul.addr %s183, 4
        %s185 = scalar_lea.vmem %s0, %s184
        %s186 = smul.u32 16, %s11
      $region36: #{tpu_custom_call.1} parent=31 // pred_fallthru
        _
    $region32: #{tpu_custom_call.1} parent=5 // pred_fallthru
      _
    %p187 = scmp.le.s32.totalorder 1, %s11
    %p188 = scmp.lt.s32.totalorder %s11, 3
    %p189 = pnand %p187, %p188
    %p190 = pneg %p189
    // Predicated region
    $region37: #{tpu_custom_call.1} parent=5 // pred_check
      _
    $region38: #{tpu_custom_call.1} parent=5 // pred_check_branch
      %192 = sbr.rel (%p189) target = $region40
    $region39: #{tpu_custom_call.1} parent=5 // pred_region
      %s193 = ssub.s32 %s11, 1
      %s194 = smul.u32 16, %s16
      %p195 = scmp.lt.s32.totalorder %s194, 31
      %s196 = scalar_select %p195, %s194, 31
      %s197 = smul.addr %s196, 4
      %s198 = scalar_lea.vmem %s0, %s197
      %p199 = pneg %p37
      %p200 = pneg %p34
      %p201 = pneg %p58
      %p202 = pneg %p55
      %p203 = pneg %p79
      %p204 = pneg %p76
      %p205 = pneg %p100
      %p206 = pneg %p97
      %p207 = pneg %p121
      %p208 = pneg %p118
      %p209 = pneg %p147
      %p210 = pneg %p144
      %s211 = smul.u32 16, %s16
      %p212 = scmp.lt.s32.totalorder %s211, 31
      %s213 = scalar_select %p212, %s211, 31
      %s214 = smul.addr %s213, 8
      %s215 = scalar_lea.vmem %s5, %s214
      %s216 = smul.u32 16, %s16
      %p217 = scmp.lt.s32.totalorder %s216, 31
      %s218 = scalar_select %p217, %s216, 31
      %s219 = smul.addr %s218, 4
      %s220 = scalar_lea.vmem %s0, %s219
      %s221 = smul.u32 16, %s16
      %s222 = smul.u32 16, %s16
      %p223 = scmp.lt.s32.totalorder %s222, 31
      %s224 = scalar_select %p223, %s222, 31
      %s225 = smul.addr %s224, 8
      %s226 = scalar_lea.vmem %s5, %s225
      %s227 = smul.u32 16, %s16
      %v229 = vld [vmem:[%s4] sm:$0x1]
      %v230 = vld [vmem:[%s4 + $0x1] sm:$0x1]
      %v231 = vld [vmem:[%s4 + $0x2] sm:$0x1]
      %v232 = vld [vmem:[%s4 + $0x3] sm:$0x1]
      %v233 = vld [vmem:[%s220] sm:$0xf]
      %v234 = vld [vmem:[%s220 + $0x4] sm:$0xf]
      %v235 = vld [vmem:[%s220 + $0x8] sm:$0xf]
      %v236 = vld [vmem:[%s220 + $0xc] sm:$0xf]
      %v237 = vld [vmem:[%s220 + $0x10] sm:$0xf]
      %v238 = vld [vmem:[%s220 + $0x14] sm:$0xf]
      %v239 = vld [vmem:[%s220 + $0x18] sm:$0xf]
      %v240 = vld [vmem:[%s220 + $0x1c] sm:$0xf]
      %v241 = vld [vmem:[%s220 + $0x20] sm:$0xf]
      %v242 = vld [vmem:[%s220 + $0x24] sm:$0xf]
      %v243 = vld [vmem:[%s220 + $0x28] sm:$0xf]
      %v244 = vld [vmem:[%s220 + $0x2c] sm:$0xf]
      %v245 = vld [vmem:[%s220 + $0x30] sm:$0xf]
      %v246 = vld [vmem:[%s220 + $0x34] sm:$0xf]
      %v247 = vld [vmem:[%s220 + $0x38] sm:$0xf]
      %v248 = vld [vmem:[%s220 + $0x3c] sm:$0xf]
      %v249 = vld [vmem:[%s1] sm:$0xf]
      %v250 = vld [vmem:[%s1 + $0x4] sm:$0xf]
      %v251 = vld [vmem:[%s1 + $0x8] sm:$0xf]
      %v252 = vld [vmem:[%s1 + $0xc] sm:$0xf]
      %v253 = vld [vmem:[%s1 + $0x10] sm:$0xf]
      %v254 = vld [vmem:[%s1 + $0x14] sm:$0xf]
      %v255 = vld [vmem:[%s1 + $0x18] sm:$0xf]
      %v256 = vld [vmem:[%s1 + $0x1c] sm:$0xf]
      %v257 = vld [vmem:[%s1 + $0x20] sm:$0x1]
      %v258 = vperm.slane %v229, 0
      %v275 = vunpack.c.l.b16 %v233
      %v276 = vunpack.c.l.b16 %v234
      %v277 = vunpack.c.l.b16 %v235
      %v278 = vunpack.c.l.b16 %v236
      %v279 = vunpack.c.l.b16 %v237
      %v280 = vunpack.c.l.b16 %v238
      %v281 = vunpack.c.l.b16 %v239
      %v282 = vunpack.c.l.b16 %v240
      %v283 = vunpack.c.l.b16 %v241
      %v284 = vunpack.c.l.b16 %v242
      %v285 = vunpack.c.l.b16 %v243
      %v286 = vunpack.c.l.b16 %v244
      %v287 = vunpack.c.l.b16 %v245
      %v288 = vunpack.c.l.b16 %v246
      %v289 = vunpack.c.l.b16 %v247
      %v290 = vunpack.c.l.b16 %v248
      %v291 = vpack.c.b16 %v276, %v275
      %v292 = vpack.c.b16 %v278, %v277
      %v293 = vpack.c.b16 %v280, %v279
      %v294 = vpack.c.b16 %v282, %v281
      %v295 = vpack.c.b16 %v284, %v283
      %v296 = vpack.c.b16 %v286, %v285
      %v297 = vpack.c.b16 %v288, %v287
      %v298 = vpack.c.b16 %v290, %v289
      %v308 = vunpack.c.l.b16 %v249
      %v309 = vunpack.c.l.b16 %v250
      %v310 = vunpack.c.l.b16 %v251
      %v311 = vunpack.c.l.b16 %v252
      %v312 = vunpack.c.l.b16 %v253
      %v313 = vunpack.c.l.b16 %v254
      %v314 = vunpack.c.l.b16 %v255
      %v315 = vunpack.c.l.b16 %v256
      %v316 = vunpack.c.l.b16 %v257
      %v317 = vpack.c.b16 %v309, %v308
      %v318 = vpack.c.b16 %v311, %v310
      %v319 = vpack.c.b16 %v313, %v312
      %v320 = vpack.c.b16 %v315, %v314
      %v321 = vpack.c.b16 %v316, %v316
      %vm326 = vcmask 531456
      %v328 = vsel %vm326, %v291, 0
      %v331 = vsel %vm326, %v292, 0
      %v334 = vsel %vm326, %v293, 0
      %v337 = vsel %vm326, %v294, 0
      %v340 = vsel %vm326, %v295, 0
      %v343 = vsel %vm326, %v296, 0
      %v346 = vsel %vm326, %v297, 0
      %v349 = vsel %vm326, %v298, 0
      %vm351 = vcmask 1040384
      %v352 = vsel 0, 4294967295, 65535
      %v353 = vsel %vm351, %v352, 0
      %v355 = vand.u32 %v321, %v353
      %357 = vmatpush.bf16.msra.mxu0 0
      %358 = vmatpush.bf16.msra.mxu0 0
      %359 = vmatpush.bf16.msra.mxu0 0
      %360 = vmatpush.bf16.msra.mxu0 %v355
      %361 = vmatpush.bf16.msra.mxu0 %v320
      %362 = vmatpush.bf16.msra.mxu0 %v319
      %363 = vmatpush.bf16.msra.mxu0 %v318
      %364 = vmatpush.bf16.msra.mxu0 %v317
      %365 = vmatmul.bf16.gmra.mxu0 %v328
      %v366 = vpop.f32.mrf.mxu0
      %v367 = vadd.f32 %v258, %v366
      %v368 = vpop.f32.mrf.mxu0
      %v369 = vadd.f32 %v258, %v368
      %370 = vmatmul.bf16.gmra.mxu0 %v331
      %v371 = vpop.f32.mrf.mxu0
      %v372 = vadd.f32 %v258, %v371
      %v373 = vpop.f32.mrf.mxu0
      %v374 = vadd.f32 %v258, %v373
      %375 = vmatmul.bf16.gmra.mxu0 %v334
      %v376 = vpop.f32.mrf.mxu0
      %v377 = vadd.f32 %v258, %v376
      %v378 = vpop.f32.mrf.mxu0
      %v379 = vadd.f32 %v258, %v378
      %380 = vmatmul.bf16.gmra.mxu0 %v337
      %v381 = vpop.f32.mrf.mxu0
      %v382 = vadd.f32 %v258, %v381
      %v383 = vpop.f32.mrf.mxu0
      %v384 = vadd.f32 %v258, %v383
      %385 = vmatmul.bf16.gmra.mxu0 %v340
      %v386 = vpop.f32.mrf.mxu0
      %v387 = vadd.f32 %v258, %v386
      %v388 = vpop.f32.mrf.mxu0
      %v389 = vadd.f32 %v258, %v388
      %390 = vmatmul.bf16.gmra.mxu0 %v343
      %v391 = vpop.f32.mrf.mxu0
      %v392 = vadd.f32 %v258, %v391
      %v393 = vpop.f32.mrf.mxu0
      %v394 = vadd.f32 %v258, %v393
      %395 = vmatmul.bf16.gmra.mxu0 %v346
      %v396 = vpop.f32.mrf.mxu0
      %v397 = vadd.f32 %v258, %v396
      %v398 = vpop.f32.mrf.mxu0
      %v399 = vadd.f32 %v258, %v398
      %400 = vmatmul.bf16.gmra.mxu0 %v349
      %v401 = vpop.f32.mrf.mxu0
      %v402 = vadd.f32 %v258, %v401
      %v403 = vpop.f32.mrf.mxu0
      %v404 = vadd.f32 %v258, %v403
      %405 = vdwg.mxu0
      %v406 = vxor.u32 %v367, 2147483648
      %v407 = vxor.u32 %v369, 2147483648
      %v408 = vxor.u32 %v372, 2147483648
      %v409 = vxor.u32 %v374, 2147483648
      %v410 = vxor.u32 %v377, 2147483648
      %v411 = vxor.u32 %v379, 2147483648
      %v412 = vxor.u32 %v382, 2147483648
      %v413 = vxor.u32 %v384, 2147483648
      %v414 = vxor.u32 %v387, 2147483648
      %v415 = vxor.u32 %v389, 2147483648
      %v416 = vxor.u32 %v392, 2147483648
      %v417 = vxor.u32 %v394, 2147483648
      %v418 = vxor.u32 %v397, 2147483648
      %v419 = vxor.u32 %v399, 2147483648
      %v420 = vxor.u32 %v402, 2147483648
      %v421 = vxor.u32 %v404, 2147483648
      %v422 = vmul.f32 %v406, 1.442695
      %v423 = vpow.pop %v422
      %v424 = vmul.f32 %v407, 1.442695
      %v425 = vpow.pop %v424
      %v426 = vmul.f32 %v408, 1.442695
      %v427 = vpow.pop %v426
      %v428 = vmul.f32 %v409, 1.442695
      %v429 = vpow.pop %v428
      %v430 = vmul.f32 %v410, 1.442695
      %v431 = vpow.pop %v430
      %v432 = vmul.f32 %v411, 1.442695
      %v433 = vpow.pop %v432
      %v434 = vmul.f32 %v412, 1.442695
      %v435 = vpow.pop %v434
      %v436 = vmul.f32 %v413, 1.442695
      %v437 = vpow.pop %v436
      %v438 = vmul.f32 %v414, 1.442695
      %v439 = vpow.pop %v438
      %v440 = vmul.f32 %v415, 1.442695
      %v441 = vpow.pop %v440
      %v442 = vmul.f32 %v416, 1.442695
      %v443 = vpow.pop %v442
      %v444 = vmul.f32 %v417, 1.442695
      %v445 = vpow.pop %v444
      %v446 = vmul.f32 %v418, 1.442695
      %v447 = vpow.pop %v446
      %v448 = vmul.f32 %v419, 1.442695
      %v449 = vpow.pop %v448
      %v450 = vmul.f32 %v420, 1.442695
      %v451 = vpow.pop %v450
      %v452 = vmul.f32 %v421, 1.442695
      %v453 = vpow.pop %v452
      %v454 = vadd.f32 %v423, 1.0
      %v455 = vadd.f32 %v425, 1.0
      %v456 = vadd.f32 %v427, 1.0
      %v457 = vadd.f32 %v429, 1.0
      %v458 = vadd.f32 %v431, 1.0
      %v459 = vadd.f32 %v433, 1.0
      %v460 = vadd.f32 %v435, 1.0
      %v461 = vadd.f32 %v437, 1.0
      %v462 = vadd.f32 %v439, 1.0
      %v463 = vadd.f32 %v441, 1.0
      %v464 = vadd.f32 %v443, 1.0
      %v465 = vadd.f32 %v445, 1.0
      %v466 = vadd.f32 %v447, 1.0
      %v467 = vadd.f32 %v449, 1.0
      %v468 = vadd.f32 %v451, 1.0
      %v469 = vadd.f32 %v453, 1.0
      %v470 = vrcp.pop %v454
      %v471 = vmul.f32 %v454, %v470
      %v472 = vsub.f32 1.0, %v471
      %v473 = vmul.f32 %v470, %v472
      %v474 = vadd.f32 %v470, %v473
      %vm475 = vweird.f32 %v454
      %vm476 = vweird.f32 %v470
      %vm477 = vmor %vm475, %vm476
      %v478 = vsel %vm477, %v470, %v474
      %v479 = vand.u32 2147483647, %v454
      %vm480 = vcmp.eq.f32.partialorder %v479, 8.507059e+37
      %v481 = vand.u32 %v454, 2147483648
      %v482 = vor.u32 1.1754944e-38, %v481
      %v483 = vsel %vm480, %v482, %v478
      %v484 = vmul.f32 1.0, %v483
      %v485 = vrcp.pop %v455
      %v486 = vmul.f32 %v455, %v485
      %v487 = vsub.f32 1.0, %v486
      %v488 = vmul.f32 %v485, %v487
      %v489 = vadd.f32 %v485, %v488
      %vm490 = vweird.f32 %v455
      %vm491 = vweird.f32 %v485
      %vm492 = vmor %vm490, %vm491
      %v493 = vsel %vm492, %v485, %v489
      %v494 = vand.u32 2147483647, %v455
      %vm495 = vcmp.eq.f32.partialorder %v494, 8.507059e+37
      %v496 = vand.u32 %v455, 2147483648
      %v497 = vor.u32 1.1754944e-38, %v496
      %v498 = vsel %vm495, %v497, %v493
      %v499 = vmul.f32 1.0, %v498
      %v500 = vrcp.pop %v456
      %v501 = vmul.f32 %v456, %v500
      %v502 = vsub.f32 1.0, %v501
      %v503 = vmul.f32 %v500, %v502
      %v504 = vadd.f32 %v500, %v503
      %vm505 = vweird.f32 %v456
      %vm506 = vweird.f32 %v500
      %vm507 = vmor %vm505, %vm506
      %v508 = vsel %vm507, %v500, %v504
      %v509 = vand.u32 2147483647, %v456
      %vm510 = vcmp.eq.f32.partialorder %v509, 8.507059e+37
      %v511 = vand.u32 %v456, 2147483648
      %v512 = vor.u32 1.1754944e-38, %v511
      %v513 = vsel %vm510, %v512, %v508
      %v514 = vmul.f32 1.0, %v513
      %v515 = vrcp.pop %v457
      %v516 = vmul.f32 %v457, %v515
      %v517 = vsub.f32 1.0, %v516
      %v518 = vmul.f32 %v515, %v517
      %v519 = vadd.f32 %v515, %v518
      %vm520 = vweird.f32 %v457
      %vm521 = vweird.f32 %v515
      %vm522 = vmor %vm520, %vm521
      %v523 = vsel %vm522, %v515, %v519
      %v524 = vand.u32 2147483647, %v457
      %vm525 = vcmp.eq.f32.partialorder %v524, 8.507059e+37
      %v526 = vand.u32 %v457, 2147483648
      %v527 = vor.u32 1.1754944e-38, %v526
      %v528 = vsel %vm525, %v527, %v523
      %v529 = vmul.f32 1.0, %v528
      %v530 = vrcp.pop %v458
      %v531 = vmul.f32 %v458, %v530
      %v532 = vsub.f32 1.0, %v531
      %v533 = vmul.f32 %v530, %v532
      %v534 = vadd.f32 %v530, %v533
      %vm535 = vweird.f32 %v458
      %vm536 = vweird.f32 %v530
      %vm537 = vmor %vm535, %vm536
      %v538 = vsel %vm537, %v530, %v534
      %v539 = vand.u32 2147483647, %v458
      %vm540 = vcmp.eq.f32.partialorder %v539, 8.507059e+37
      %v541 = vand.u32 %v458, 2147483648
      %v542 = vor.u32 1.1754944e-38, %v541
      %v543 = vsel %vm540, %v542, %v538
      %v544 = vmul.f32 1.0, %v543
      %v545 = vrcp.pop %v459
      %v546 = vmul.f32 %v459, %v545
      %v547 = vsub.f32 1.0, %v546
      %v548 = vmul.f32 %v545, %v547
      %v549 = vadd.f32 %v545, %v548
      %vm550 = vweird.f32 %v459
      %vm551 = vweird.f32 %v545
      %vm552 = vmor %vm550, %vm551
      %v553 = vsel %vm552, %v545, %v549
      %v554 = vand.u32 2147483647, %v459
      %vm555 = vcmp.eq.f32.partialorder %v554, 8.507059e+37
      %v556 = vand.u32 %v459, 2147483648
      %v557 = vor.u32 1.1754944e-38, %v556
      %v558 = vsel %vm555, %v557, %v553
      %v559 = vmul.f32 1.0, %v558
      %v560 = vrcp.pop %v460
      %v561 = vmul.f32 %v460, %v560
      %v562 = vsub.f32 1.0, %v561
      %v563 = vmul.f32 %v560, %v562
      %v564 = vadd.f32 %v560, %v563
      %vm565 = vweird.f32 %v460
      %vm566 = vweird.f32 %v560
      %vm567 = vmor %vm565, %vm566
      %v568 = vsel %vm567, %v560, %v564
      %v569 = vand.u32 2147483647, %v460
      %vm570 = vcmp.eq.f32.partialorder %v569, 8.507059e+37
      %v571 = vand.u32 %v460, 2147483648
      %v572 = vor.u32 1.1754944e-38, %v571
      %v573 = vsel %vm570, %v572, %v568
      %v574 = vmul.f32 1.0, %v573
      %v575 = vrcp.pop %v461
      %v576 = vmul.f32 %v461, %v575
      %v577 = vsub.f32 1.0, %v576
      %v578 = vmul.f32 %v575, %v577
      %v579 = vadd.f32 %v575, %v578
      %vm580 = vweird.f32 %v461
      %vm581 = vweird.f32 %v575
      %vm582 = vmor %vm580, %vm581
      %v583 = vsel %vm582, %v575, %v579
      %v584 = vand.u32 2147483647, %v461
      %vm585 = vcmp.eq.f32.partialorder %v584, 8.507059e+37
      %v586 = vand.u32 %v461, 2147483648
      %v587 = vor.u32 1.1754944e-38, %v586
      %v588 = vsel %vm585, %v587, %v583
      %v589 = vmul.f32 1.0, %v588
      %v590 = vrcp.pop %v462
      %v591 = vmul.f32 %v462, %v590
      %v592 = vsub.f32 1.0, %v591
      %v593 = vmul.f32 %v590, %v592
      %v594 = vadd.f32 %v590, %v593
      %vm595 = vweird.f32 %v462
      %vm596 = vweird.f32 %v590
      %vm597 = vmor %vm595, %vm596
      %v598 = vsel %vm597, %v590, %v594
      %v599 = vand.u32 2147483647, %v462
      %vm600 = vcmp.eq.f32.partialorder %v599, 8.507059e+37
      %v601 = vand.u32 %v462, 2147483648
      %v602 = vor.u32 1.1754944e-38, %v601
      %v603 = vsel %vm600, %v602, %v598
      %v604 = vmul.f32 1.0, %v603
      %v605 = vrcp.pop %v463
      %v606 = vmul.f32 %v463, %v605
      %v607 = vsub.f32 1.0, %v606
      %v608 = vmul.f32 %v605, %v607
      %v609 = vadd.f32 %v605, %v608
      %vm610 = vweird.f32 %v463
      %vm611 = vweird.f32 %v605
      %vm612 = vmor %vm610, %vm611
      %v613 = vsel %vm612, %v605, %v609
      %v614 = vand.u32 2147483647, %v463
      %vm615 = vcmp.eq.f32.partialorder %v614, 8.507059e+37
      %v616 = vand.u32 %v463, 2147483648
      %v617 = vor.u32 1.1754944e-38, %v616
      %v618 = vsel %vm615, %v617, %v613
      %v619 = vmul.f32 1.0, %v618
      %v620 = vrcp.pop %v464
      %v621 = vmul.f32 %v464, %v620
      %v622 = vsub.f32 1.0, %v621
      %v623 = vmul.f32 %v620, %v622
      %v624 = vadd.f32 %v620, %v623
      %vm625 = vweird.f32 %v464
      %vm626 = vweird.f32 %v620
      %vm627 = vmor %vm625, %vm626
      %v628 = vsel %vm627, %v620, %v624
      %v629 = vand.u32 2147483647, %v464
      %vm630 = vcmp.eq.f32.partialorder %v629, 8.507059e+37
      %v631 = vand.u32 %v464, 2147483648
      %v632 = vor.u32 1.1754944e-38, %v631
      %v633 = vsel %vm630, %v632, %v628
      %v634 = vmul.f32 1.0, %v633
      %v635 = vrcp.pop %v465
      %v636 = vmul.f32 %v465, %v635
      %v637 = vsub.f32 1.0, %v636
      %v638 = vmul.f32 %v635, %v637
      %v639 = vadd.f32 %v635, %v638
      %vm640 = vweird.f32 %v465
      %vm641 = vweird.f32 %v635
      %vm642 = vmor %vm640, %vm641
      %v643 = vsel %vm642, %v635, %v639
      %v644 = vand.u32 2147483647, %v465
      %vm645 = vcmp.eq.f32.partialorder %v644, 8.507059e+37
      %v646 = vand.u32 %v465, 2147483648
      %v647 = vor.u32 1.1754944e-38, %v646
      %v648 = vsel %vm645, %v647, %v643
      %v649 = vmul.f32 1.0, %v648
      %v650 = vrcp.pop %v466
      %v651 = vmul.f32 %v466, %v650
      %v652 = vsub.f32 1.0, %v651
      %v653 = vmul.f32 %v650, %v652
      %v654 = vadd.f32 %v650, %v653
      %vm655 = vweird.f32 %v466
      %vm656 = vweird.f32 %v650
      %vm657 = vmor %vm655, %vm656
      %v658 = vsel %vm657, %v650, %v654
      %v659 = vand.u32 2147483647, %v466
      %vm660 = vcmp.eq.f32.partialorder %v659, 8.507059e+37
      %v661 = vand.u32 %v466, 2147483648
      %v662 = vor.u32 1.1754944e-38, %v661
      %v663 = vsel %vm660, %v662, %v658
      %v664 = vmul.f32 1.0, %v663
      %v665 = vrcp.pop %v467
      %v666 = vmul.f32 %v467, %v665
      %v667 = vsub.f32 1.0, %v666
      %v668 = vmul.f32 %v665, %v667
      %v669 = vadd.f32 %v665, %v668
      %vm670 = vweird.f32 %v467
      %vm671 = vweird.f32 %v665
      %vm672 = vmor %vm670, %vm671
      %v673 = vsel %vm672, %v665, %v669
      %v674 = vand.u32 2147483647, %v467
      %vm675 = vcmp.eq.f32.partialorder %v674, 8.507059e+37
      %v676 = vand.u32 %v467, 2147483648
      %v677 = vor.u32 1.1754944e-38, %v676
      %v678 = vsel %vm675, %v677, %v673
      %v679 = vmul.f32 1.0, %v678
      %v680 = vrcp.pop %v468
      %v681 = vmul.f32 %v468, %v680
      %v682 = vsub.f32 1.0, %v681
      %v683 = vmul.f32 %v680, %v682
      %v684 = vadd.f32 %v680, %v683
      %vm685 = vweird.f32 %v468
      %vm686 = vweird.f32 %v680
      %vm687 = vmor %vm685, %vm686
      %v688 = vsel %vm687, %v680, %v684
      %v689 = vand.u32 2147483647, %v468
      %vm690 = vcmp.eq.f32.partialorder %v689, 8.507059e+37
      %v691 = vand.u32 %v468, 2147483648
      %v692 = vor.u32 1.1754944e-38, %v691
      %v693 = vsel %vm690, %v692, %v688
      %v694 = vmul.f32 1.0, %v693
      %v695 = vrcp.pop %v469
      %v696 = vmul.f32 %v469, %v695
      %v697 = vsub.f32 1.0, %v696
      %v698 = vmul.f32 %v695, %v697
      %v699 = vadd.f32 %v695, %v698
      %vm700 = vweird.f32 %v469
      %vm701 = vweird.f32 %v695
      %vm702 = vmor %vm700, %vm701
      %v703 = vsel %vm702, %v695, %v699
      %v704 = vand.u32 2147483647, %v469
      %vm705 = vcmp.eq.f32.partialorder %v704, 8.507059e+37
      %v706 = vand.u32 %v469, 2147483648
      %v707 = vor.u32 1.1754944e-38, %v706
      %v708 = vsel %vm705, %v707, %v703
      %v709 = vmul.f32 1.0, %v708
      %v710 = vmul.f32 %v367, %v484
      %v711 = vmul.f32 %v369, %v499
      %v712 = vmul.f32 %v372, %v514
      %v713 = vmul.f32 %v374, %v529
      %v714 = vmul.f32 %v377, %v544
      %v715 = vmul.f32 %v379, %v559
      %v716 = vmul.f32 %v382, %v574
      %v717 = vmul.f32 %v384, %v589
      %v718 = vmul.f32 %v387, %v604
      %v719 = vmul.f32 %v389, %v619
      %v720 = vmul.f32 %v392, %v634
      %v721 = vmul.f32 %v394, %v649
      %v722 = vmul.f32 %v397, %v664
      %v723 = vmul.f32 %v399, %v679
      %v724 = vmul.f32 %v402, %v694
      %v725 = vmul.f32 %v404, %v709
      %v726 = vunpack.c.l.bf16 %v233
      %v727 = vunpack.c.l.bf16 %v234
      %v728 = vunpack.c.l.bf16 %v235
      %v729 = vunpack.c.l.bf16 %v236
      %v730 = vunpack.c.l.bf16 %v237
      %v731 = vunpack.c.l.bf16 %v238
      %v732 = vunpack.c.l.bf16 %v239
      %v733 = vunpack.c.l.bf16 %v240
      %v734 = vunpack.c.l.bf16 %v241
      %v735 = vunpack.c.l.bf16 %v242
      %v736 = vunpack.c.l.bf16 %v243
      %v737 = vunpack.c.l.bf16 %v244
      %v738 = vunpack.c.l.bf16 %v245
      %v739 = vunpack.c.l.bf16 %v246
      %v740 = vunpack.c.l.bf16 %v247
      %v741 = vunpack.c.l.bf16 %v248
      %v742 = vpack.c.bf16 %v711, %v710
      %v743 = vpack.c.bf16 %v713, %v712
      %v744 = vpack.c.bf16 %v715, %v714
      %v745 = vpack.c.bf16 %v717, %v716
      %v746 = vpack.c.bf16 %v719, %v718
      %v747 = vpack.c.bf16 %v721, %v720
      %v748 = vpack.c.bf16 %v723, %v722
      %v749 = vpack.c.bf16 %v725, %v724
      %v750 = vld [vmem:[%s2] sm:$0xf]
      %v751 = vld [vmem:[%s2 + $0x4] sm:$0xf]
      %v752 = vld [vmem:[%s2 + $0x8] sm:$0xf]
      %v753 = vld [vmem:[%s2 + $0xc] sm:$0xf]
      %755 = vset.pattern.permute.xlu0 64
      %756 = vperm.xlu0 %755, %v726
      %v757 = vpop.permute.xlu0 %756
      %760 = vset.pattern.permute.xlu0 64
      %761 = vperm.xlu0 %760, %v727
      %v762 = vpop.permute.xlu0 %761
      %765 = vset.pattern.permute.xlu0 64
      %766 = vperm.xlu0 %765, %v728
      %v767 = vpop.permute.xlu0 %766
      %770 = vset.pattern.permute.xlu0 64
      %771 = vperm.xlu0 %770, %v729
      %v772 = vpop.permute.xlu0 %771
      %775 = vset.pattern.permute.xlu0 64
      %776 = vperm.xlu0 %775, %v730
      %v777 = vpop.permute.xlu0 %776
      %780 = vset.pattern.permute.xlu0 64
      %781 = vperm.xlu0 %780, %v731
      %v782 = vpop.permute.xlu0 %781
      %785 = vset.pattern.permute.xlu0 64
      %786 = vperm.xlu0 %785, %v732
      %v787 = vpop.permute.xlu0 %786
      %790 = vset.pattern.permute.xlu0 64
      %791 = vperm.xlu0 %790, %v733
      %v792 = vpop.permute.xlu0 %791
      %795 = vset.pattern.permute.xlu0 64
      %796 = vperm.xlu0 %795, %v734
      %v797 = vpop.permute.xlu0 %796
      %800 = vset.pattern.permute.xlu0 64
      %801 = vperm.xlu0 %800, %v735
      %v802 = vpop.permute.xlu0 %801
      %805 = vset.pattern.permute.xlu0 64
      %806 = vperm.xlu0 %805, %v736
      %v807 = vpop.permute.xlu0 %806
      %810 = vset.pattern.permute.xlu0 64
      %811 = vperm.xlu0 %810, %v737
      %v812 = vpop.permute.xlu0 %811
      %815 = vset.pattern.permute.xlu0 64
      %816 = vperm.xlu0 %815, %v738
      %v817 = vpop.permute.xlu0 %816
      %820 = vset.pattern.permute.xlu0 64
      %821 = vperm.xlu0 %820, %v739
      %v822 = vpop.permute.xlu0 %821
      %825 = vset.pattern.permute.xlu0 64
      %826 = vperm.xlu0 %825, %v740
      %v827 = vpop.permute.xlu0 %826
      %830 = vset.pattern.permute.xlu0 64
      %831 = vperm.xlu0 %830, %v741
      %v832 = vpop.permute.xlu0 %831
      %v834 = vperm.slane %v232, 0
      %v835 = vmul.f32 %v757, %v834
      %v836 = vmul.f32 %v762, %v834
      %v837 = vmul.f32 %v767, %v834
      %v838 = vmul.f32 %v772, %v834
      %v839 = vmul.f32 %v777, %v834
      %v840 = vmul.f32 %v782, %v834
      %v841 = vmul.f32 %v787, %v834
      %v842 = vmul.f32 %v792, %v834
      %v843 = vmul.f32 %v797, %v834
      %v844 = vmul.f32 %v802, %v834
      %v845 = vmul.f32 %v807, %v834
      %v846 = vmul.f32 %v812, %v834
      %v847 = vmul.f32 %v817, %v834
      %v848 = vmul.f32 %v822, %v834
      %v849 = vmul.f32 %v827, %v834
      %v850 = vmul.f32 %v832, %v834
      %v855 = vunpack.c.l.b16 %v750
      %v856 = vunpack.c.l.b16 %v751
      %v857 = vunpack.c.l.b16 %v752
      %v858 = vunpack.c.l.b16 %v753
      %v859 = vpack.c.b16 %v856, %v855
      %v860 = vpack.c.b16 %v858, %v857
      %vm863 = vcmask 261120
      %v865 = vsel %vm863, %v742, 0
      %v868 = vsel %vm863, %v743, 0
      %v871 = vsel %vm863, %v744, 0
      %v874 = vsel %vm863, %v745, 0
      %v877 = vsel %vm863, %v746, 0
      %v880 = vsel %vm863, %v747, 0
      %v883 = vsel %vm863, %v748, 0
      %v886 = vsel %vm863, %v749, 0
      %888 = vmatpush.bf16.msra.mxu0 0
      %889 = vmatpush.bf16.msra.mxu0 0
      %890 = vmatpush.bf16.msra.mxu0 0
      %891 = vmatpush.bf16.msra.mxu0 0
      %892 = vmatpush.bf16.msra.mxu0 0
      %893 = vmatpush.bf16.msra.mxu0 0
      %894 = vmatpush.bf16.msra.mxu0 %v860
      %895 = vmatpush.bf16.msra.mxu0 %v859
      %896 = vmatmul.bf16.gmra.mxu0 %v865
      %v897 = vpop.f32.mrf.mxu0
      %v898 = vadd.f32 %v835, %v897
      %v899 = vpop.f32.mrf.mxu0
      %v900 = vadd.f32 %v836, %v899
      %901 = vmatmul.bf16.gmra.mxu0 %v868
      %v902 = vpop.f32.mrf.mxu0
      %v903 = vadd.f32 %v837, %v902
      %v904 = vpop.f32.mrf.mxu0
      %v905 = vadd.f32 %v838, %v904
      %906 = vmatmul.bf16.gmra.mxu0 %v871
      %v907 = vpop.f32.mrf.mxu0
      %v908 = vadd.f32 %v839, %v907
      %v909 = vpop.f32.mrf.mxu0
      %v910 = vadd.f32 %v840, %v909
      %911 = vmatmul.bf16.gmra.mxu0 %v874
      %v912 = vpop.f32.mrf.mxu0
      %v913 = vadd.f32 %v841, %v912
      %v914 = vpop.f32.mrf.mxu0
      %v915 = vadd.f32 %v842, %v914
      %916 = vmatmul.bf16.gmra.mxu0 %v877
      %v917 = vpop.f32.mrf.mxu0
      %v918 = vadd.f32 %v843, %v917
      %v919 = vpop.f32.mrf.mxu0
      %v920 = vadd.f32 %v844, %v919
      %921 = vmatmul.bf16.gmra.mxu0 %v880
      %v922 = vpop.f32.mrf.mxu0
      %v923 = vadd.f32 %v845, %v922
      %v924 = vpop.f32.mrf.mxu0
      %v925 = vadd.f32 %v846, %v924
      %926 = vmatmul.bf16.gmra.mxu0 %v883
      %v927 = vpop.f32.mrf.mxu0
      %v928 = vadd.f32 %v847, %v927
      %v929 = vpop.f32.mrf.mxu0
      %v930 = vadd.f32 %v848, %v929
      %931 = vmatmul.bf16.gmra.mxu0 %v886
      %v932 = vpop.f32.mrf.mxu0
      %v933 = vadd.f32 %v849, %v932
      %v934 = vpop.f32.mrf.mxu0
      %v935 = vadd.f32 %v850, %v934
      %936 = vdwg.mxu0
      %v937 = vperm.slane %v230, 0
      %v938 = vadd.f32 %v898, %v937
      %v939 = vadd.f32 %v900, %v937
      %v940 = vadd.f32 %v903, %v937
      %v941 = vadd.f32 %v905, %v937
      %v942 = vadd.f32 %v908, %v937
      %v943 = vadd.f32 %v910, %v937
      %v944 = vadd.f32 %v913, %v937
      %v945 = vadd.f32 %v915, %v937
      %v946 = vadd.f32 %v918, %v937
      %v947 = vadd.f32 %v920, %v937
      %v948 = vadd.f32 %v923, %v937
      %v949 = vadd.f32 %v925, %v937
      %v950 = vadd.f32 %v928, %v937
      %v951 = vadd.f32 %v930, %v937
      %v952 = vadd.f32 %v933, %v937
      %v953 = vadd.f32 %v935, %v937
      %v954 = vxor.u32 %v938, 2147483648
      %v955 = vxor.u32 %v939, 2147483648
      %v956 = vxor.u32 %v940, 2147483648
      %v957 = vxor.u32 %v941, 2147483648
      %v958 = vxor.u32 %v942, 2147483648
      %v959 = vxor.u32 %v943, 2147483648
      %v960 = vxor.u32 %v944, 2147483648
      %v961 = vxor.u32 %v945, 2147483648
      %v962 = vxor.u32 %v946, 2147483648
      %v963 = vxor.u32 %v947, 2147483648
      %v964 = vxor.u32 %v948, 2147483648
      %v965 = vxor.u32 %v949, 2147483648
      %v966 = vxor.u32 %v950, 2147483648
      %v967 = vxor.u32 %v951, 2147483648
      %v968 = vxor.u32 %v952, 2147483648
      %v969 = vxor.u32 %v953, 2147483648
      %v970 = vmul.f32 %v954, 1.442695
      %v971 = vpow.pop %v970
      %v972 = vmul.f32 %v955, 1.442695
      %v973 = vpow.pop %v972
      %v974 = vmul.f32 %v956, 1.442695
      %v975 = vpow.pop %v974
      %v976 = vmul.f32 %v957, 1.442695
      %v977 = vpow.pop %v976
      %v978 = vmul.f32 %v958, 1.442695
      %v979 = vpow.pop %v978
      %v980 = vmul.f32 %v959, 1.442695
      %v981 = vpow.pop %v980
      %v982 = vmul.f32 %v960, 1.442695
      %v983 = vpow.pop %v982
      %v984 = vmul.f32 %v961, 1.442695
      %v985 = vpow.pop %v984
      %v986 = vmul.f32 %v962, 1.442695
      %v987 = vpow.pop %v986
      %v988 = vmul.f32 %v963, 1.442695
      %v989 = vpow.pop %v988
      %v990 = vmul.f32 %v964, 1.442695
      %v991 = vpow.pop %v990
      %v992 = vmul.f32 %v965, 1.442695
      %v993 = vpow.pop %v992
      %v994 = vmul.f32 %v966, 1.442695
      %v995 = vpow.pop %v994
      %v996 = vmul.f32 %v967, 1.442695
      %v997 = vpow.pop %v996
      %v998 = vmul.f32 %v968, 1.442695
      %v999 = vpow.pop %v998
      %v1000 = vmul.f32 %v969, 1.442695
      %v1001 = vpow.pop %v1000
      %v1002 = vadd.f32 %v971, 1.0
      %v1003 = vadd.f32 %v973, 1.0
      %v1004 = vadd.f32 %v975, 1.0
      %v1005 = vadd.f32 %v977, 1.0
      %v1006 = vadd.f32 %v979, 1.0
      %v1007 = vadd.f32 %v981, 1.0
      %v1008 = vadd.f32 %v983, 1.0
      %v1009 = vadd.f32 %v985, 1.0
      %v1010 = vadd.f32 %v987, 1.0
      %v1011 = vadd.f32 %v989, 1.0
      %v1012 = vadd.f32 %v991, 1.0
      %v1013 = vadd.f32 %v993, 1.0
      %v1014 = vadd.f32 %v995, 1.0
      %v1015 = vadd.f32 %v997, 1.0
      %v1016 = vadd.f32 %v999, 1.0
      %v1017 = vadd.f32 %v1001, 1.0
      %v1018 = vrcp.pop %v1002
      %v1019 = vmul.f32 %v1002, %v1018
      %v1020 = vsub.f32 1.0, %v1019
      %v1021 = vmul.f32 %v1018, %v1020
      %v1022 = vadd.f32 %v1018, %v1021
      %vm1023 = vweird.f32 %v1002
      %vm1024 = vweird.f32 %v1018
      %vm1025 = vmor %vm1023, %vm1024
      %v1026 = vsel %vm1025, %v1018, %v1022
      %v1027 = vand.u32 2147483647, %v1002
      %vm1028 = vcmp.eq.f32.partialorder %v1027, 8.507059e+37
      %v1029 = vand.u32 %v1002, 2147483648
      %v1030 = vor.u32 1.1754944e-38, %v1029
      %v1031 = vsel %vm1028, %v1030, %v1026
      %v1032 = vmul.f32 1.0, %v1031
      %v1033 = vrcp.pop %v1003
      %v1034 = vmul.f32 %v1003, %v1033
      %v1035 = vsub.f32 1.0, %v1034
      %v1036 = vmul.f32 %v1033, %v1035
      %v1037 = vadd.f32 %v1033, %v1036
      %vm1038 = vweird.f32 %v1003
      %vm1039 = vweird.f32 %v1033
      %vm1040 = vmor %vm1038, %vm1039
      %v1041 = vsel %vm1040, %v1033, %v1037
      %v1042 = vand.u32 2147483647, %v1003
      %vm1043 = vcmp.eq.f32.partialorder %v1042, 8.507059e+37
      %v1044 = vand.u32 %v1003, 2147483648
      %v1045 = vor.u32 1.1754944e-38, %v1044
      %v1046 = vsel %vm1043, %v1045, %v1041
      %v1047 = vmul.f32 1.0, %v1046
      %v1048 = vrcp.pop %v1004
      %v1049 = vmul.f32 %v1004, %v1048
      %v1050 = vsub.f32 1.0, %v1049
      %v1051 = vmul.f32 %v1048, %v1050
      %v1052 = vadd.f32 %v1048, %v1051
      %vm1053 = vweird.f32 %v1004
      %vm1054 = vweird.f32 %v1048
      %vm1055 = vmor %vm1053, %vm1054
      %v1056 = vsel %vm1055, %v1048, %v1052
      %v1057 = vand.u32 2147483647, %v1004
      %vm1058 = vcmp.eq.f32.partialorder %v1057, 8.507059e+37
      %v1059 = vand.u32 %v1004, 2147483648
      %v1060 = vor.u32 1.1754944e-38, %v1059
      %v1061 = vsel %vm1058, %v1060, %v1056
      %v1062 = vmul.f32 1.0, %v1061
      %v1063 = vrcp.pop %v1005
      %v1064 = vmul.f32 %v1005, %v1063
      %v1065 = vsub.f32 1.0, %v1064
      %v1066 = vmul.f32 %v1063, %v1065
      %v1067 = vadd.f32 %v1063, %v1066
      %vm1068 = vweird.f32 %v1005
      %vm1069 = vweird.f32 %v1063
      %vm1070 = vmor %vm1068, %vm1069
      %v1071 = vsel %vm1070, %v1063, %v1067
      %v1072 = vand.u32 2147483647, %v1005
      %vm1073 = vcmp.eq.f32.partialorder %v1072, 8.507059e+37
      %v1074 = vand.u32 %v1005, 2147483648
      %v1075 = vor.u32 1.1754944e-38, %v1074
      %v1076 = vsel %vm1073, %v1075, %v1071
      %v1077 = vmul.f32 1.0, %v1076
      %v1078 = vrcp.pop %v1006
      %v1079 = vmul.f32 %v1006, %v1078
      %v1080 = vsub.f32 1.0, %v1079
      %v1081 = vmul.f32 %v1078, %v1080
      %v1082 = vadd.f32 %v1078, %v1081
      %vm1083 = vweird.f32 %v1006
      %vm1084 = vweird.f32 %v1078
      %vm1085 = vmor %vm1083, %vm1084
      %v1086 = vsel %vm1085, %v1078, %v1082
      %v1087 = vand.u32 2147483647, %v1006
      %vm1088 = vcmp.eq.f32.partialorder %v1087, 8.507059e+37
      %v1089 = vand.u32 %v1006, 2147483648
      %v1090 = vor.u32 1.1754944e-38, %v1089
      %v1091 = vsel %vm1088, %v1090, %v1086
      %v1092 = vmul.f32 1.0, %v1091
      %v1093 = vrcp.pop %v1007
      %v1094 = vmul.f32 %v1007, %v1093
      %v1095 = vsub.f32 1.0, %v1094
      %v1096 = vmul.f32 %v1093, %v1095
      %v1097 = vadd.f32 %v1093, %v1096
      %vm1098 = vweird.f32 %v1007
      %vm1099 = vweird.f32 %v1093
      %vm1100 = vmor %vm1098, %vm1099
      %v1101 = vsel %vm1100, %v1093, %v1097
      %v1102 = vand.u32 2147483647, %v1007
      %vm1103 = vcmp.eq.f32.partialorder %v1102, 8.507059e+37
      %v1104 = vand.u32 %v1007, 2147483648
      %v1105 = vor.u32 1.1754944e-38, %v1104
      %v1106 = vsel %vm1103, %v1105, %v1101
      %v1107 = vmul.f32 1.0, %v1106
      %v1108 = vrcp.pop %v1008
      %v1109 = vmul.f32 %v1008, %v1108
      %v1110 = vsub.f32 1.0, %v1109
      %v1111 = vmul.f32 %v1108, %v1110
      %v1112 = vadd.f32 %v1108, %v1111
      %vm1113 = vweird.f32 %v1008
      %vm1114 = vweird.f32 %v1108
      %vm1115 = vmor %vm1113, %vm1114
      %v1116 = vsel %vm1115, %v1108, %v1112
      %v1117 = vand.u32 2147483647, %v1008
      %vm1118 = vcmp.eq.f32.partialorder %v1117, 8.507059e+37
      %v1119 = vand.u32 %v1008, 2147483648
      %v1120 = vor.u32 1.1754944e-38, %v1119
      %v1121 = vsel %vm1118, %v1120, %v1116
      %v1122 = vmul.f32 1.0, %v1121
      %v1123 = vrcp.pop %v1009
      %v1124 = vmul.f32 %v1009, %v1123
      %v1125 = vsub.f32 1.0, %v1124
      %v1126 = vmul.f32 %v1123, %v1125
      %v1127 = vadd.f32 %v1123, %v1126
      %vm1128 = vweird.f32 %v1009
      %vm1129 = vweird.f32 %v1123
      %vm1130 = vmor %vm1128, %vm1129
      %v1131 = vsel %vm1130, %v1123, %v1127
      %v1132 = vand.u32 2147483647, %v1009
      %vm1133 = vcmp.eq.f32.partialorder %v1132, 8.507059e+37
      %v1134 = vand.u32 %v1009, 2147483648
      %v1135 = vor.u32 1.1754944e-38, %v1134
      %v1136 = vsel %vm1133, %v1135, %v1131
      %v1137 = vmul.f32 1.0, %v1136
      %v1138 = vrcp.pop %v1010
      %v1139 = vmul.f32 %v1010, %v1138
      %v1140 = vsub.f32 1.0, %v1139
      %v1141 = vmul.f32 %v1138, %v1140
      %v1142 = vadd.f32 %v1138, %v1141
      %vm1143 = vweird.f32 %v1010
      %vm1144 = vweird.f32 %v1138
      %vm1145 = vmor %vm1143, %vm1144
      %v1146 = vsel %vm1145, %v1138, %v1142
      %v1147 = vand.u32 2147483647, %v1010
      %vm1148 = vcmp.eq.f32.partialorder %v1147, 8.507059e+37
      %v1149 = vand.u32 %v1010, 2147483648
      %v1150 = vor.u32 1.1754944e-38, %v1149
      %v1151 = vsel %vm1148, %v1150, %v1146
      %v1152 = vmul.f32 1.0, %v1151
      %v1153 = vrcp.pop %v1011
      %v1154 = vmul.f32 %v1011, %v1153
      %v1155 = vsub.f32 1.0, %v1154
      %v1156 = vmul.f32 %v1153, %v1155
      %v1157 = vadd.f32 %v1153, %v1156
      %vm1158 = vweird.f32 %v1011
      %vm1159 = vweird.f32 %v1153
      %vm1160 = vmor %vm1158, %vm1159
      %v1161 = vsel %vm1160, %v1153, %v1157
      %v1162 = vand.u32 2147483647, %v1011
      %vm1163 = vcmp.eq.f32.partialorder %v1162, 8.507059e+37
      %v1164 = vand.u32 %v1011, 2147483648
      %v1165 = vor.u32 1.1754944e-38, %v1164
      %v1166 = vsel %vm1163, %v1165, %v1161
      %v1167 = vmul.f32 1.0, %v1166
      %v1168 = vrcp.pop %v1012
      %v1169 = vmul.f32 %v1012, %v1168
      %v1170 = vsub.f32 1.0, %v1169
      %v1171 = vmul.f32 %v1168, %v1170
      %v1172 = vadd.f32 %v1168, %v1171
      %vm1173 = vweird.f32 %v1012
      %vm1174 = vweird.f32 %v1168
      %vm1175 = vmor %vm1173, %vm1174
      %v1176 = vsel %vm1175, %v1168, %v1172
      %v1177 = vand.u32 2147483647, %v1012
      %vm1178 = vcmp.eq.f32.partialorder %v1177, 8.507059e+37
      %v1179 = vand.u32 %v1012, 2147483648
      %v1180 = vor.u32 1.1754944e-38, %v1179
      %v1181 = vsel %vm1178, %v1180, %v1176
      %v1182 = vmul.f32 1.0, %v1181
      %v1183 = vrcp.pop %v1013
      %v1184 = vmul.f32 %v1013, %v1183
      %v1185 = vsub.f32 1.0, %v1184
      %v1186 = vmul.f32 %v1183, %v1185
      %v1187 = vadd.f32 %v1183, %v1186
      %vm1188 = vweird.f32 %v1013
      %vm1189 = vweird.f32 %v1183
      %vm1190 = vmor %vm1188, %vm1189
      %v1191 = vsel %vm1190, %v1183, %v1187
      %v1192 = vand.u32 2147483647, %v1013
      %vm1193 = vcmp.eq.f32.partialorder %v1192, 8.507059e+37
      %v1194 = vand.u32 %v1013, 2147483648
      %v1195 = vor.u32 1.1754944e-38, %v1194
      %v1196 = vsel %vm1193, %v1195, %v1191
      %v1197 = vmul.f32 1.0, %v1196
      %v1198 = vrcp.pop %v1014
      %v1199 = vmul.f32 %v1014, %v1198
      %v1200 = vsub.f32 1.0, %v1199
      %v1201 = vmul.f32 %v1198, %v1200
      %v1202 = vadd.f32 %v1198, %v1201
      %vm1203 = vweird.f32 %v1014
      %vm1204 = vweird.f32 %v1198
      %vm1205 = vmor %vm1203, %vm1204
      %v1206 = vsel %vm1205, %v1198, %v1202
      %v1207 = vand.u32 2147483647, %v1014
      %vm1208 = vcmp.eq.f32.partialorder %v1207, 8.507059e+37
      %v1209 = vand.u32 %v1014, 2147483648
      %v1210 = vor.u32 1.1754944e-38, %v1209
      %v1211 = vsel %vm1208, %v1210, %v1206
      %v1212 = vmul.f32 1.0, %v1211
      %v1213 = vrcp.pop %v1015
      %v1214 = vmul.f32 %v1015, %v1213
      %v1215 = vsub.f32 1.0, %v1214
      %v1216 = vmul.f32 %v1213, %v1215
      %v1217 = vadd.f32 %v1213, %v1216
      %vm1218 = vweird.f32 %v1015
      %vm1219 = vweird.f32 %v1213
      %vm1220 = vmor %vm1218, %vm1219
      %v1221 = vsel %vm1220, %v1213, %v1217
      %v1222 = vand.u32 2147483647, %v1015
      %vm1223 = vcmp.eq.f32.partialorder %v1222, 8.507059e+37
      %v1224 = vand.u32 %v1015, 2147483648
      %v1225 = vor.u32 1.1754944e-38, %v1224
      %v1226 = vsel %vm1223, %v1225, %v1221
      %v1227 = vmul.f32 1.0, %v1226
      %v1228 = vrcp.pop %v1016
      %v1229 = vmul.f32 %v1016, %v1228
      %v1230 = vsub.f32 1.0, %v1229
      %v1231 = vmul.f32 %v1228, %v1230
      %v1232 = vadd.f32 %v1228, %v1231
      %vm1233 = vweird.f32 %v1016
      %vm1234 = vweird.f32 %v1228
      %vm1235 = vmor %vm1233, %vm1234
      %v1236 = vsel %vm1235, %v1228, %v1232
      %v1237 = vand.u32 2147483647, %v1016
      %vm1238 = vcmp.eq.f32.partialorder %v1237, 8.507059e+37
      %v1239 = vand.u32 %v1016, 2147483648
      %v1240 = vor.u32 1.1754944e-38, %v1239
      %v1241 = vsel %vm1238, %v1240, %v1236
      %v1242 = vmul.f32 1.0, %v1241
      %v1243 = vrcp.pop %v1017
      %v1244 = vmul.f32 %v1017, %v1243
      %v1245 = vsub.f32 1.0, %v1244
      %v1246 = vmul.f32 %v1243, %v1245
      %v1247 = vadd.f32 %v1243, %v1246
      %vm1248 = vweird.f32 %v1017
      %vm1249 = vweird.f32 %v1243
      %vm1250 = vmor %vm1248, %vm1249
      %v1251 = vsel %vm1250, %v1243, %v1247
      %v1252 = vand.u32 2147483647, %v1017
      %vm1253 = vcmp.eq.f32.partialorder %v1252, 8.507059e+37
      %v1254 = vand.u32 %v1017, 2147483648
      %v1255 = vor.u32 1.1754944e-38, %v1254
      %v1256 = vsel %vm1253, %v1255, %v1251
      %v1257 = vmul.f32 1.0, %v1256
      %v1258 = vmul.f32 %v938, %v1032
      %v1259 = vmul.f32 %v939, %v1047
      %v1260 = vmul.f32 %v940, %v1062
      %v1261 = vmul.f32 %v941, %v1077
      %v1262 = vmul.f32 %v942, %v1092
      %v1263 = vmul.f32 %v943, %v1107
      %v1264 = vmul.f32 %v944, %v1122
      %v1265 = vmul.f32 %v945, %v1137
      %v1266 = vmul.f32 %v946, %v1152
      %v1267 = vmul.f32 %v947, %v1167
      %v1268 = vmul.f32 %v948, %v1182
      %v1269 = vmul.f32 %v949, %v1197
      %v1270 = vmul.f32 %v950, %v1212
      %v1271 = vmul.f32 %v951, %v1227
      %v1272 = vmul.f32 %v952, %v1242
      %v1273 = vmul.f32 %v953, %v1257
      %v1274 = vpack.c.bf16 %v1259, %v1258
      %v1275 = vpack.c.bf16 %v1261, %v1260
      %v1276 = vpack.c.bf16 %v1263, %v1262
      %v1277 = vpack.c.bf16 %v1265, %v1264
      %v1278 = vpack.c.bf16 %v1267, %v1266
      %v1279 = vpack.c.bf16 %v1269, %v1268
      %v1280 = vpack.c.bf16 %v1271, %v1270
      %v1281 = vpack.c.bf16 %v1273, %v1272
      %v1282 = vld [vmem:[%s3] sm:$0xf]
      %v1283 = vld [vmem:[%s3 + $0x4] sm:$0xf]
      %v1284 = vperm.slane %v231, 0
      %v1287 = vunpack.c.l.b16 %v1282
      %v1288 = vunpack.c.l.b16 %v1283
      %v1289 = vpack.c.b16 %v1288, %v1287
      %vm1291 = vcmask 130048
      %v1293 = vsel %vm1291, %v1274, 0
      %v1296 = vsel %vm1291, %v1275, 0
      %v1299 = vsel %vm1291, %v1276, 0
      %v1302 = vsel %vm1291, %v1277, 0
      %v1305 = vsel %vm1291, %v1278, 0
      %v1308 = vsel %vm1291, %v1279, 0
      %v1311 = vsel %vm1291, %v1280, 0
      %v1314 = vsel %vm1291, %v1281, 0
      %1316 = vmatpush.bf16.msra.mxu0 0
      %1317 = vmatpush.bf16.msra.mxu0 0
      %1318 = vmatpush.bf16.msra.mxu0 0
      %1319 = vmatpush.bf16.msra.mxu0 0
      %1320 = vmatpush.bf16.msra.mxu0 0
      %1321 = vmatpush.bf16.msra.mxu0 0
      %1322 = vmatpush.bf16.msra.mxu0 0
      %1323 = vmatpush.bf16.msra.mxu0 %v1289
      %1324 = vmatmul.bf16.gmra.mxu0 %v1293
      %v1325 = vpop.f32.mrf.mxu0
      %v1326 = vadd.f32 %v1284, %v1325
      %v1327 = vpop.f32.mrf.mxu0
      %v1328 = vadd.f32 %v1284, %v1327
      %1329 = vmatmul.bf16.gmra.mxu0 %v1296
      %v1330 = vpop.f32.mrf.mxu0
      %v1331 = vadd.f32 %v1284, %v1330
      %v1332 = vpop.f32.mrf.mxu0
      %v1333 = vadd.f32 %v1284, %v1332
      %1334 = vmatmul.bf16.gmra.mxu0 %v1299
      %v1335 = vpop.f32.mrf.mxu0
      %v1336 = vadd.f32 %v1284, %v1335
      %v1337 = vpop.f32.mrf.mxu0
      %v1338 = vadd.f32 %v1284, %v1337
      %1339 = vmatmul.bf16.gmra.mxu0 %v1302
      %v1340 = vpop.f32.mrf.mxu0
      %v1341 = vadd.f32 %v1284, %v1340
      %v1342 = vpop.f32.mrf.mxu0
      %v1343 = vadd.f32 %v1284, %v1342
      %1344 = vmatmul.bf16.gmra.mxu0 %v1305
      %v1345 = vpop.f32.mrf.mxu0
      %v1346 = vadd.f32 %v1284, %v1345
      %v1347 = vpop.f32.mrf.mxu0
      %v1348 = vadd.f32 %v1284, %v1347
      %1349 = vmatmul.bf16.gmra.mxu0 %v1308
      %v1350 = vpop.f32.mrf.mxu0
      %v1351 = vadd.f32 %v1284, %v1350
      %v1352 = vpop.f32.mrf.mxu0
      %v1353 = vadd.f32 %v1284, %v1352
      %1354 = vmatmul.bf16.gmra.mxu0 %v1311
      %v1355 = vpop.f32.mrf.mxu0
      %v1356 = vadd.f32 %v1284, %v1355
      %v1357 = vpop.f32.mrf.mxu0
      %v1358 = vadd.f32 %v1284, %v1357
      %1359 = vmatmul.bf16.gmra.mxu0 %v1314
      %v1360 = vpop.f32.mrf.mxu0
      %v1361 = vadd.f32 %v1284, %v1360
      %v1362 = vpop.f32.mrf.mxu0
      %v1363 = vadd.f32 %v1284, %v1362
      %1364 = vdwg.mxu0
      %vm1365 = vcmask 31744
      %1366 = vst.msk [vmem:[%s226] sm:$0xff] %vm1365, %v1326
      %1367 = vst.msk [vmem:[%s226 + $0x8] sm:$0xff] %vm1365, %v1328
      %1368 = vst.msk [vmem:[%s226 + $0x10] sm:$0xff] %vm1365, %v1331
      %1369 = vst.msk [vmem:[%s226 + $0x18] sm:$0xff] %vm1365, %v1333
      %1370 = vst.msk [vmem:[%s226 + $0x20] sm:$0xff] %vm1365, %v1336
      %1371 = vst.msk [vmem:[%s226 + $0x28] sm:$0xff] %vm1365, %v1338
      %1372 = vst.msk [vmem:[%s226 + $0x30] sm:$0xff] %vm1365, %v1341
      %1373 = vst.msk [vmem:[%s226 + $0x38] sm:$0xff] %vm1365, %v1343
      %1374 = vst.msk [vmem:[%s226 + $0x40] sm:$0xff] %vm1365, %v1346
      %1375 = vst.msk [vmem:[%s226 + $0x48] sm:$0xff] %vm1365, %v1348
      %1376 = vst.msk [vmem:[%s226 + $0x50] sm:$0xff] %vm1365, %v1351
      %1377 = vst.msk [vmem:[%s226 + $0x58] sm:$0xff] %vm1365, %v1353
      %1378 = vst.msk [vmem:[%s226 + $0x60] sm:$0xff] %vm1365, %v1356
      %1379 = vst.msk [vmem:[%s226 + $0x68] sm:$0xff] %vm1365, %v1358
      %1380 = vst.msk [vmem:[%s226 + $0x70] sm:$0xff] %vm1365, %v1361
      %1381 = vst.msk [vmem:[%s226 + $0x78] sm:$0xff] %vm1365, %v1363
      %s1382 = smul.u32 16, %s16
      %p1383 = scmp.lt.s32.totalorder %s1382, 31
      %s1384 = scalar_select %p1383, %s1382, 31
      %s1385 = smul.addr %s1384, 8
      %s1386 = scalar_lea.vmem %s5, %s1385
      // Predicated region
      $region41: #{tpu_custom_call.1} parent=39 // pred_check
        %p1387 = pneg %p144
      $region42: #{tpu_custom_call.1} parent=39 // pred_check_branch
        %1389 = sbr.rel (%p1387) target = $region44
      $region43: #{tpu_custom_call.1} parent=39 // pred_region
        %s1390 = smul.u32 16, %s16
      $region44: #{tpu_custom_call.1} parent=39 // pred_fallthru
        _
    $region40: #{tpu_custom_call.1} parent=5 // pred_fallthru
      _
    %p1391 = scmp.le.s32.totalorder 2, %s11
    // Predicated region
    $region45: #{tpu_custom_call.1} parent=5 // pred_check
      %p1392 = pneg %p1391
    $region46: #{tpu_custom_call.1} parent=5 // pred_check_branch
      %1394 = sbr.rel (%p1392) target = $region48
    $region47: #{tpu_custom_call.1} parent=5 // pred_region
      %s1395 = ssub.s32 %s11, 2
      // Predicated region
      $region49: #{tpu_custom_call.1} parent=47 // pred_check
        %p1396 = pneg %p150
      $region50: #{tpu_custom_call.1} parent=47 // pred_check_branch
        %1398 = sbr.rel (%p1396) target = $region52
      $region51: #{tpu_custom_call.1} parent=47 // pred_region
        %s1399 = smul.u32 16, %s17
        %p1400 = scmp.lt.s32.totalorder %s1399, 31
        %s1401 = scalar_select %p1400, %s1399, 31
        %s1402 = smul.addr %s1401, 8
        %s1403 = scalar_lea.vmem %s5, %s1402
      $region52: #{tpu_custom_call.1} parent=47 // pred_fallthru
        _
    $region48: #{tpu_custom_call.1} parent=5 // pred_fallthru
      _
  $region6: #{tpu_custom_call.1} parent=0 // loop_footer
    %s15 = sadd.s32 1, %s11
  $region7: #{tpu_custom_call.1} parent=0 // loop_footer_branch
    %10 = sbr.rel target = $region3
  $region8: #{tpu_custom_call.1} parent=0 // loop_exit
    _

</llo_original>
